<compile_context>
chip_gen: v7x
topology: tpu7x:2x2x1
jax: 0.10.0
libtpu: 0.0.40
codegen_flags: <defaults>
</compile_context>

<pallas_src>
import jax
import jax.numpy as jnp
from jax import lax
from jax.experimental import pallas as pl
from jax.experimental.pallas import tpu as pltpu

# ----------------------------- model / layout constants -----------------------------
D_IN, D_HID, D_OUT = 34, 10, 1        # ActivityNN defaults
HP, OUTP = 16, 8                      # padded hidden width / output-row count
MIN_TB = 128                          # lane-dense output tile granularity


def _round_up(a, m):
    return ((a + m - 1) // m) * m


# ----------------------------------- kernel -----------------------------------------
def activity_nn_kernel(w1_ref, w2_ref, w3_ref, b_ref, x_ref, o_ref):
    # x tile: (TB, 34) f32 straight from HBM; cast to bf16 in-kernel (cheap VPU pass,
    # overlapped with the next tile's DMA).  Contraction K=34 is handled by Mosaic
    # (padding lanes are masked in the matmul lowering).
    x = x_ref[...].astype(jnp.bfloat16)                       # (TB, 34)

    # Pre-cast bf16 weights + f32 biases, all VMEM-resident (constant index_map).
    w1 = w1_ref[...]                                          # (34, 16) bf16
    w2 = w2_ref[...]                                          # (16, 16) bf16
    w3 = w3_ref[...]                                          # ( 8, 16) bf16
    b1 = b_ref[0:1, :]                                        # (1, 16)  f32
    b2 = b_ref[1:2, :]                                        # (1, 16)  f32
    b3 = b_ref[2:3, 0:1]                                      # (1, 1)   f32

    # dense1 + ReLU  (bf16 MXU operands, f32 accumulate, f32 elementwise)
    h1 = jnp.dot(x, w1, preferred_element_type=jnp.float32) + b1
    h1 = jnp.maximum(h1, 0.0)

    # dropout -> identity (eval mode)

    # dense2 + ReLU
    h2 = jnp.dot(h1.astype(jnp.bfloat16), w2,
                 preferred_element_type=jnp.float32) + b2
    h2 = jnp.maximum(h2, 0.0)

    # output layer: contract w3 dim 1 with h2 dim 1 -> (OUTP, TB), lane-dense.
    # No explicit transpose; Mosaic folds it into MXU operand staging.
    logits = lax.dot_general(
        w3, h2.astype(jnp.bfloat16),
        dimension_numbers=(((1,), (1,)), ((), ())),
        preferred_element_type=jnp.float32)                   # (8, TB); row 0 is real

    # sigmoid + lane-dense (1, TB) store (unmasked, contiguous vst).
    o_ref[...] = jax.nn.sigmoid(logits[0:1, :] + b3)


# ----------------------------------- wrapper -----------------------------------------
def pack_params(params):
    """Pack PyTorch-layout params (w: (out,in), b: (out,)) into pre-cast bf16 weight
    blocks (lane-padded to 16) plus one small f32 bias block."""
    w1, b1 = params["w1"], params["b1"]   # (10,34), (10,)
    w2, b2 = params["w2"], params["b2"]   # (10,10), (10,)
    w3, b3 = params["w3"], params["b3"]   # (1,10),  (1,)

    w1t = jnp.zeros((D_IN, HP), jnp.bfloat16)
    w1t = w1t.at[:, :w1.shape[0]].set(w1.T.astype(jnp.bfloat16))          # (34, 16)
    w2t = jnp.zeros((HP, HP), jnp.bfloat16)
    w2t = w2t.at[:w2.shape[1], :w2.shape[0]].set(w2.T.astype(jnp.bfloat16))  # (16, 16)
    w3p = jnp.zeros((OUTP, HP), jnp.bfloat16)
    w3p = w3p.at[:w3.shape[0], :w3.shape[1]].set(w3.astype(jnp.bfloat16))    # (8, 16)

    bias = jnp.zeros((8, HP), jnp.float32)
    bias = bias.at[0, :b1.shape[0]].set(b1)
    bias = bias.at[1, :b2.shape[0]].set(b2)
    bias = bias.at[2, 0].set(b3[0])
    return w1t, w2t, w3p, bias


def activity_nn_forward(x, params, *, block_rows=4096):
    """x: (B, 34) float32. params: PyTorch-layout dict of w1,b1,w2,b2,w3,b3."""
    B, k_in = x.shape
    assert k_in == D_IN, f"expected input_dim={D_IN}, got {k_in}"

    # Tight batch padding: pad only to MIN_TB granularity, then pick TB adaptively so
    # at most ~n_steps*128 rows are wasted (instead of rounding B up to a full TB).
    B_pad128 = max(_round_up(B, MIN_TB), MIN_TB)
    n_steps = pl.cdiv(B_pad128, block_rows)
    if B_pad128 >= 1024:
        # Give v7x's two TensorCores at least one tile each (harmless on v5e/v6e).
        n_steps = max(n_steps, 2)
    TB = _round_up(pl.cdiv(B_pad128, n_steps), MIN_TB)
    B_pad = n_steps * TB
    grid = (n_steps,)

    # No feature pad, no dtype cast host-side; batch pad only when actually needed.
    xp = x if B_pad == B else jnp.pad(x, ((0, B_pad - B), (0, 0)))

    w1t, w2t, w3p, bias = pack_params(params)   # in serving, pack once and reuse

    cost = pl.CostEstimate(
        flops=2 * B_pad * (D_IN * HP + HP * HP + HP * OUTP),
        transcendentals=B_pad,                       # one exp per row (sigmoid)
        bytes_accessed=(B_pad * D_IN * 4 + B_pad * 4
                        + (D_IN + HP + OUTP) * HP * 2 + 8 * HP * 4),
    )

    out = pl.pallas_call(
        activity_nn_kernel,
        out_shape=jax.ShapeDtypeStruct((1, B_pad), jnp.float32),   # lane-dense output
        grid=grid,
        in_specs=[
            # Parameters: constant index_map -> fetched once, VMEM-resident.
            pl.BlockSpec((D_IN, HP), lambda i: (0, 0)),   # w1^T bf16
            pl.BlockSpec((HP, HP), lambda i: (0, 0)),     # w2^T bf16
            pl.BlockSpec((OUTP, HP), lambda i: (0, 0)),   # w3   bf16
            pl.BlockSpec((8, HP), lambda i: (0, 0)),      # biases f32
            # x: one (TB, 34) f32 batch tile per grid step (auto double-buffered);
            # last dim equals the full array dim, so the HBM read is contiguous.
            pl.BlockSpec((TB, D_IN), lambda i: (i, 0)),
        ],
        out_specs=pl.BlockSpec((1, TB), lambda i: (0, i)),
        compiler_params=pltpu.CompilerParams(
            dimension_semantics=("parallel",),
            vmem_limit_bytes=32 * 1024 * 1024),
        cost_estimate=cost,
    )(w1t, w2t, w3p, bias, xp)

    return out[0, :B].reshape(B, 1)


def init_params(key, input_dim=D_IN, num_hidden_units=D_HID, output_features=D_OUT):
    """PyTorch nn.Linear default init (uniform +-1/sqrt(fan_in)), PyTorch layout."""
    ks = jax.random.split(key, 6)

    def linear(kw, kb, fan_in, fan_out):
        bound = 1.0 / jnp.sqrt(float(fan_in))
        w = jax.random.uniform(kw, (fan_out, fan_in), jnp.float32, -bound, bound)
        b = jax.random.uniform(kb, (fan_out,), jnp.float32, -bound, bound)
        return w, b

    w1, b1 = linear(ks[0], ks[1], input_dim, num_hidden_units)
    w2, b2 = linear(ks[2], ks[3], num_hidden_units, num_hidden_units)
    w3, b3 = linear(ks[4], ks[5], num_hidden_units, output_features)
    return {"w1": w1, "b1": b1, "w2": w2, "b2": b2, "w3": w3, "b3": b3}


if __name__ == "__main__":
    key = jax.random.PRNGKey(0)
    k_x, k_p = jax.random.split(key)

    batch, input_dim, num_hidden_units, output_features = 8, 34, 10, 1

    x = jax.random.normal(k_x, (batch, input_dim), dtype=jnp.float32)
    params = init_params(k_p, input_dim, num_hidden_units, output_features)

    out = activity_nn_forward(x, params)
    jax.block_until_ready(out)

    # Pure-JAX reference with matching bf16 rounding of the MXU operands.
    bf = lambda a: a.astype(jnp.bfloat16).astype(jnp.float32)
    h1 = jnp.maximum(bf(x) @ bf(params["w1"]).T + params["b1"], 0.0)
    h2 = jnp.maximum(bf(h1) @ bf(params["w2"]).T + params["b2"], 0.0)
    ref = jax.nn.sigmoid(bf(h2) @ bf(params["w3"]).T + params["b3"])

    assert out.shape == (batch, output_features)
    assert jnp.allclose(out, ref, atol=1e-3, rtol=1e-3), float(jnp.max(jnp.abs(out - ref)))

    print("KERNEL_OK")
</pallas_src>

<mosaic_0001>
module attributes {stable_mosaic.version = 11 : i64} {
  func.func @activity_nn_kernel(%arg0: i32, %arg1: memref<34x16xbf16, #tpu.memory_space<vmem>>, %arg2: memref<16x16xbf16, #tpu.memory_space<vmem>>, %arg3: memref<8x16xbf16, #tpu.memory_space<vmem>>, %arg4: memref<8x16xf32, #tpu.memory_space<vmem>>, %arg5: memref<128x34xf32, #tpu.memory_space<vmem>>, %arg6: memref<1x128xf32, #tpu.memory_space<vmem>>) attributes {dimension_semantics = [#tpu.dimension_semantics<parallel>], iteration_bounds = array<i64: 1>, scalar_prefetch = 0 : i64, scratch_operands = 0 : i64, tpu.core_type = #tpu.core_type<tc>, window_params = [{pipeline_mode = #tpu.pipeline_mode<synchronous>, transform_indices = @transform_0, window_bounds = array<i64: 34, 16>}, {pipeline_mode = #tpu.pipeline_mode<synchronous>, transform_indices = @transform_1, window_bounds = array<i64: 16, 16>}, {pipeline_mode = #tpu.pipeline_mode<synchronous>, transform_indices = @transform_2, window_bounds = array<i64: 8, 16>}, {pipeline_mode = #tpu.pipeline_mode<synchronous>, transform_indices = @transform_3, window_bounds = array<i64: 8, 16>}, {transform_indices = @transform_4, window_bounds = array<i64: 128, 34>}, {transform_indices = @transform_5, window_bounds = array<i64: 1, 128>}]} {
    %c0 = arith.constant 0 : index
    %c0_0 = arith.constant 0 : index
    %0 = vector.load %arg5[%c0, %c0_0] : memref<128x34xf32, #tpu.memory_space<vmem>>, vector<128x34xf32>
    %1 = arith.truncf %0 : vector<128x34xf32> to vector<128x34xbf16>
    %c0_1 = arith.constant 0 : index
    %c0_2 = arith.constant 0 : index
    %2 = vector.load %arg1[%c0_1, %c0_2] : memref<34x16xbf16, #tpu.memory_space<vmem>>, vector<34x16xbf16>
    %c0_3 = arith.constant 0 : index
    %c0_4 = arith.constant 0 : index
    %3 = vector.load %arg2[%c0_3, %c0_4] : memref<16x16xbf16, #tpu.memory_space<vmem>>, vector<16x16xbf16>
    %c0_5 = arith.constant 0 : index
    %c0_6 = arith.constant 0 : index
    %4 = vector.load %arg3[%c0_5, %c0_6] : memref<8x16xbf16, #tpu.memory_space<vmem>>, vector<8x16xbf16>
    %c0_7 = arith.constant 0 : index
    %c0_8 = arith.constant 0 : index
    %5 = vector.load %arg4[%c0_7, %c0_8] : memref<8x16xf32, #tpu.memory_space<vmem>>, vector<1x16xf32>
    %c1 = arith.constant 1 : index
    %c0_9 = arith.constant 0 : index
    %6 = vector.load %arg4[%c1, %c0_9] : memref<8x16xf32, #tpu.memory_space<vmem>>, vector<1x16xf32>
    %c2 = arith.constant 2 : index
    %c0_10 = arith.constant 0 : index
    %7 = vector.load %arg4[%c2, %c0_10] : memref<8x16xf32, #tpu.memory_space<vmem>>, vector<1x1xf32>
    %cst = arith.constant dense<0.000000e+00> : vector<128x16xf32>
    %8 = tpu.matmul %1, %2, %cst {dimension_numbers = #tpu.dot_dimension_numbers<[1], [0], [0], [1], [0, 0, 1, 1], [], []>} : vector<128x34xbf16>, vector<34x16xbf16>, vector<128x16xf32> -> vector<128x16xf32>
    %9 = vector.broadcast %5 : vector<1x16xf32> to vector<128x16xf32>
    %10 = arith.addf %8, %9 : vector<128x16xf32>
    %cst_11 = arith.constant 0.000000e+00 : f32
    %11 = vector.broadcast %cst_11 : f32 to vector<128x16xf32>
    %12 = arith.maximumf %10, %11 : vector<128x16xf32>
    %13 = arith.truncf %12 : vector<128x16xf32> to vector<128x16xbf16>
    %cst_12 = arith.constant dense<0.000000e+00> : vector<128x16xf32>
    %14 = tpu.matmul %13, %3, %cst_12 {dimension_numbers = #tpu.dot_dimension_numbers<[1], [0], [0], [1], [0, 0, 1, 1], [], []>} : vector<128x16xbf16>, vector<16x16xbf16>, vector<128x16xf32> -> vector<128x16xf32>
    %15 = vector.broadcast %6 : vector<1x16xf32> to vector<128x16xf32>
    %16 = arith.addf %14, %15 : vector<128x16xf32>
    %cst_13 = arith.constant 0.000000e+00 : f32
    %17 = vector.broadcast %cst_13 : f32 to vector<128x16xf32>
    %18 = arith.maximumf %16, %17 : vector<128x16xf32>
    %19 = arith.truncf %18 : vector<128x16xf32> to vector<128x16xbf16>
    %cst_14 = arith.constant dense<0.000000e+00> : vector<8x128xf32>
    %20 = tpu.matmul %4, %19, %cst_14 {dimension_numbers = #tpu.dot_dimension_numbers<[1], [1], [0], [0], [0, 0, 1, 0], [], []>} : vector<8x16xbf16>, vector<128x16xbf16>, vector<8x128xf32> -> vector<8x128xf32>
    %21 = vector.extract_strided_slice %20 {offsets = [0, 0], sizes = [1, 128], strides = [1, 1]} : vector<8x128xf32> to vector<1x128xf32>
    %22 = vector.broadcast %7 : vector<1x1xf32> to vector<1x128xf32>
    %23 = arith.addf %21, %22 : vector<1x128xf32>
    %24 = arith.negf %23 : vector<1x128xf32>
    %25 = math.exp %24 : vector<1x128xf32>
    %cst_15 = arith.constant 1.000000e+00 : f32
    %26 = vector.broadcast %cst_15 : f32 to vector<1x128xf32>
    %27 = arith.addf %26, %25 : vector<1x128xf32>
    %28 = arith.divf %26, %27 : vector<1x128xf32>
    %c0_16 = arith.constant 0 : index
    %c0_17 = arith.constant 0 : index
    %29 = vector.load %arg6[%c0_16, %c0_17] : memref<1x128xf32, #tpu.memory_space<vmem>>, vector<1x128xf32>
    tpu.vector_store %arg6[%c0_16, %c0_17], %28 {strides = array<i32>} : memref<1x128xf32, #tpu.memory_space<vmem>>, vector<1x128xf32>,
    return
  }
  func.func @transform_0(%arg0: i32) -> (i32, i32) {
    %c0_i32 = arith.constant 0 : i32
    %c0_i32_0 = arith.constant 0 : i32
    %c0_i32_1 = arith.constant 0 : i32
    return %c0_i32, %c0_i32_0 : i32, i32
  }
  func.func @transform_1(%arg0: i32) -> (i32, i32) {
    %c0_i32 = arith.constant 0 : i32
    %c0_i32_0 = arith.constant 0 : i32
    %c0_i32_1 = arith.constant 0 : i32
    return %c0_i32, %c0_i32_0 : i32, i32
  }
  func.func @transform_2(%arg0: i32) -> (i32, i32) {
    %c0_i32 = arith.constant 0 : i32
    %c0_i32_0 = arith.constant 0 : i32
    %c0_i32_1 = arith.constant 0 : i32
    return %c0_i32, %c0_i32_0 : i32, i32
  }
  func.func @transform_3(%arg0: i32) -> (i32, i32) {
    %c0_i32 = arith.constant 0 : i32
    %c0_i32_0 = arith.constant 0 : i32
    %c0_i32_1 = arith.constant 0 : i32
    return %c0_i32, %c0_i32_0 : i32, i32
  }
  func.func @transform_4(%arg0: i32) -> (i32, i32) {
    %c0_i32 = arith.constant 0 : i32
    %c0_i32_0 = arith.constant 0 : i32
    return %arg0, %c0_i32 : i32, i32
  }
  func.func @transform_5(%arg0: i32) -> (i32, i32) {
    %c0_i32 = arith.constant 0 : i32
    %c0_i32_0 = arith.constant 0 : i32
    return %c0_i32, %arg0 : i32, i32
  }
}

</mosaic_0001>

<llo_original>
// kernel: tpu_custom_call.1
$region0: #{tpu_custom_call.1}
  #allocation0 [shape = 'u32[]', space=smem, size = 0x4, offset = 0x4, fixed_abs, tag = 'smem constant byte address 0x4 - core index']
  #allocation1 [shape = 'u32[144,128]{1,0:T(1,128)}', space=vmem, size = 0x12000, scoped, tag = 'internal scratch']
  %s0 = inlined_call_operand.vmem [shape: bf16[34,16], index: 0, kind: input, shape index: {}]
  %s1 = inlined_call_operand.vmem [shape: bf16[16,16], index: 1, kind: input, shape index: {}]
  %s2 = inlined_call_operand.vmem [shape: bf16[8,16], index: 2, kind: input, shape index: {}]
  %s3 = inlined_call_operand.vmem [shape: f32[8,16], index: 3, kind: input, shape index: {}]
  %s4 = inlined_call_operand.vmem [shape: f32[128,34], index: 4, kind: input, shape index: {}]
  %s5 = inlined_call_operand.hbm [shape: f32[1,128], index: 5, kind: output, shape index: {}]
  %s6 = sld [smem:[#allocation0]]
  $region30: #{tpu_custom_call.1} parent=0
    _
  %s8 = ssub.s32 1, %s6
  %s9 = scalar_select 0, %s8, %s6
  $region1: #{tpu_custom_call.1} parent=0
    #allocation2 [shape = 'u8[512]{0}', space=vmem, size = 0x400, scoped, tag = 'output window, operand 0, single buffered']
    #allocation3 [shape = 's32[1]{0}', space=sflag, size = 0x4, scoped, tag = 'scoped memory for tpu_custom_call.1']
    %10 = vsyncpa [#allocation3], 0
    // Predicated region
    $region2: #{tpu_custom_call.1} parent=1 // pred_check
      _
    $region3: #{tpu_custom_call.1} parent=1 // pred_check_branch
      %12 = sbr.rel (0) target = $region5
    $region4: #{tpu_custom_call.1} parent=1 // pred_region
      _
    $region5: #{tpu_custom_call.1} parent=1 // pred_fallthru
      _
    // Predicated region
    $region6: #{tpu_custom_call.1} parent=1 // pred_check
      _
    $region7: #{tpu_custom_call.1} parent=1 // pred_check_branch
      %14 = sbr.rel (0) target = $region9
    $region8: #{tpu_custom_call.1} parent=1 // pred_region
      _
    $region9: #{tpu_custom_call.1} parent=1 // pred_fallthru
      _
    // Predicated region
    $region10: #{tpu_custom_call.1} parent=1 // pred_check
      _
    $region11: #{tpu_custom_call.1} parent=1 // pred_check_branch
      %16 = sbr.rel (0) target = $region13
    $region12: #{tpu_custom_call.1} parent=1 // pred_region
      _
    $region13: #{tpu_custom_call.1} parent=1 // pred_fallthru
      _
    // Predicated region
    $region14: #{tpu_custom_call.1} parent=1 // pred_check
      _
    $region15: #{tpu_custom_call.1} parent=1 // pred_check_branch
      %18 = sbr.rel (0) target = $region17
    $region16: #{tpu_custom_call.1} parent=1 // pred_region
      _
    $region17: #{tpu_custom_call.1} parent=1 // pred_fallthru
      _
    // Predicated region
    $region18: #{tpu_custom_call.1} parent=1 // pred_check
      _
    $region19: #{tpu_custom_call.1} parent=1 // pred_check_branch
      %20 = sbr.rel (0) target = $region21
    $region20: #{tpu_custom_call.1} parent=1 // pred_region
      _
    $region21: #{tpu_custom_call.1} parent=1 // pred_fallthru
      _
    %v22 = vld [vmem:[%s4] sm:$0xff]
    %v23 = vld [vmem:[%s4 + $0x8] sm:$0xff]
    %v24 = vld [vmem:[%s4 + $0x10] sm:$0xff]
    %v25 = vld [vmem:[%s4 + $0x18] sm:$0xff]
    %v26 = vld [vmem:[%s4 + $0x20] sm:$0xff]
    %v27 = vld [vmem:[%s4 + $0x28] sm:$0xff]
    %v28 = vld [vmem:[%s4 + $0x30] sm:$0xff]
    %v29 = vld [vmem:[%s4 + $0x38] sm:$0xff]
    %v30 = vld [vmem:[%s4 + $0x40] sm:$0xff]
    %v31 = vld [vmem:[%s4 + $0x48] sm:$0xff]
    %v32 = vld [vmem:[%s4 + $0x50] sm:$0xff]
    %v33 = vld [vmem:[%s4 + $0x58] sm:$0xff]
    %v34 = vld [vmem:[%s4 + $0x60] sm:$0xff]
    %v35 = vld [vmem:[%s4 + $0x68] sm:$0xff]
    %v36 = vld [vmem:[%s4 + $0x70] sm:$0xff]
    %v37 = vld [vmem:[%s4 + $0x78] sm:$0xff]
    %v38 = vpack.c.bf16 %v23, %v22
    %v39 = vpack.c.bf16 %v25, %v24
    %v40 = vpack.c.bf16 %v27, %v26
    %v41 = vpack.c.bf16 %v29, %v28
    %v42 = vpack.c.bf16 %v31, %v30
    %v43 = vpack.c.bf16 %v33, %v32
    %v44 = vpack.c.bf16 %v35, %v34
    %v45 = vpack.c.bf16 %v37, %v36
    %v46 = vld [vmem:[%s0] sm:$0xf]
    %v47 = vld [vmem:[%s0 + $0x4] sm:$0xf]
    %v48 = vld [vmem:[%s0 + $0x8] sm:$0xf]
    %v49 = vld [vmem:[%s0 + $0xc] sm:$0xf]
    %v50 = vld [vmem:[%s0 + $0x10] sm:$0x1]
    %v51 = vld [vmem:[%s1] sm:$0xf]
    %v52 = vld [vmem:[%s1 + $0x4] sm:$0xf]
    %v53 = vld [vmem:[%s2] sm:$0xf]
    %v54 = vld [vmem:[%s3] sm:$0x1]
    %v55 = vld [vmem:[%s3 + $0x1] sm:$0x1]
    %v56 = vld [vmem:[%s3 + $0x2] sm:$0x1]
    %v57 = vlaneseq
    %v58 = vshrl.u32 %v57, 7
    %v59 = vsub.s32 0, %v58
    %v60 = vrot.slane %v54, %v59
    %v66 = vunpack.c.l.b16 %v46
    %v67 = vunpack.c.l.b16 %v47
    %v68 = vunpack.c.l.b16 %v48
    %v69 = vunpack.c.l.b16 %v49
    %v70 = vunpack.c.l.b16 %v50
    %v71 = vpack.c.b16 %v67, %v66
    %v72 = vpack.c.b16 %v69, %v68
    %v73 = vpack.c.b16 %v70, %v70
    %vm76 = vcmask 277504
    %v78 = vsel %vm76, %v38, 0
    %v81 = vsel %vm76, %v39, 0
    %v84 = vsel %vm76, %v40, 0
    %v87 = vsel %vm76, %v41, 0
    %v90 = vsel %vm76, %v42, 0
    %v93 = vsel %vm76, %v43, 0
    %v96 = vsel %vm76, %v44, 0
    %v99 = vsel %vm76, %v45, 0
    %vm101 = vcmask 1040384
    %v103 = vsel %vm101, %v73, 0
    %105 = vmatprep.subr.bf16.mxu0 0
    %106 = vmatpush1.bf16.msra.mxu0 %v71
    %107 = vmatprep.subr.bf16.mxu0 0
    %108 = vmatpush1.bf16.msra.mxu0 %v72
    %109 = vmatprep.subr.bf16.mxu0 0
    %110 = vmatpush1.bf16.msra.mxu0 %v103
    %111 = vmatprep.subr.bf16.mxu0 0
    %112 = vmatpush1.bf16.msra.mxu0 0
    %113 = vmatprep.subr.bf16.mxu0 0
    %114 = vmatpush1.bf16.msra.mxu0 0
    %115 = vmatprep.subr.bf16.mxu0 0
    %116 = vmatpush1.bf16.msra.mxu0 0
    %117 = vmatprep.subr.bf16.mxu0 0
    %118 = vmatpush1.bf16.msra.mxu0 0
    %119 = vmatprep.subr.bf16.mxu0 0
    %120 = vmatpush1.bf16.msra.mxu0 0
    %121 = vmatprep.subr.bf16.mxu0 0
    %122 = vmatpush1.bf16.msra.mxu0 0
    %123 = vmatprep.subr.bf16.mxu0 0
    %124 = vmatpush1.bf16.msra.mxu0 0
    %125 = vmatprep.subr.bf16.mxu0 0
    %126 = vmatpush1.bf16.msra.mxu0 0
    %127 = vmatprep.subr.bf16.mxu0 0
    %128 = vmatpush1.bf16.msra.mxu0 0
    %129 = vmatprep.subr.bf16.mxu0 0
    %130 = vmatpush1.bf16.msra.mxu0 0
    %131 = vmatprep.subr.bf16.mxu0 0
    %132 = vmatpush1.bf16.msra.mxu0 0
    %133 = vmatprep.subr.bf16.mxu0 0
    %134 = vmatpush1.bf16.msra.mxu0 0
    %135 = vmatprep.subr.bf16.mxu0 0
    %136 = vmatpush1.bf16.msra.mxu0 0
    %137 = vmatprep.mubr.bf16.mxu0 0
    %138 = vmatmul.mubr.bf16.gmra.mrb[0].mxu0 %v78
    %v139 = vpop.f32.mrb[0].mxu0
    %v140 = vadd.f32 %v60, %v139
    %v141 = vpop.f32.mrb[0].mxu0
    %v142 = vpop.f32.mrb[0].mxu0
    %v143 = vadd.f32 %v60, %v142
    %v144 = vpop.f32.mrb[0].mxu0
    %145 = vmatprep.mubr.bf16.mxu0 0
    %146 = vmatmul.mubr.bf16.gmra.mrb[0].mxu0 %v81
    %v147 = vpop.f32.mrb[0].mxu0
    %v148 = vadd.f32 %v60, %v147
    %v149 = vpop.f32.mrb[0].mxu0
    %v150 = vpop.f32.mrb[0].mxu0
    %v151 = vadd.f32 %v60, %v150
    %v152 = vpop.f32.mrb[0].mxu0
    %153 = vmatprep.mubr.bf16.mxu0 0
    %154 = vmatmul.mubr.bf16.gmra.mrb[0].mxu0 %v84
    %v155 = vpop.f32.mrb[0].mxu0
    %v156 = vadd.f32 %v60, %v155
    %v157 = vpop.f32.mrb[0].mxu0
    %v158 = vpop.f32.mrb[0].mxu0
    %v159 = vadd.f32 %v60, %v158
    %v160 = vpop.f32.mrb[0].mxu0
    %161 = vmatprep.mubr.bf16.mxu0 0
    %162 = vmatmul.mubr.bf16.gmra.mrb[0].mxu0 %v87
    %v163 = vpop.f32.mrb[0].mxu0
    %v164 = vadd.f32 %v60, %v163
    %v165 = vpop.f32.mrb[0].mxu0
    %v166 = vpop.f32.mrb[0].mxu0
    %v167 = vadd.f32 %v60, %v166
    %v168 = vpop.f32.mrb[0].mxu0
    %169 = vmatprep.mubr.bf16.mxu0 0
    %170 = vmatmul.mubr.bf16.gmra.mrb[0].mxu0 %v90
    %v171 = vpop.f32.mrb[0].mxu0
    %v172 = vadd.f32 %v60, %v171
    %v173 = vpop.f32.mrb[0].mxu0
    %v174 = vpop.f32.mrb[0].mxu0
    %v175 = vadd.f32 %v60, %v174
    %v176 = vpop.f32.mrb[0].mxu0
    %177 = vmatprep.mubr.bf16.mxu0 0
    %178 = vmatmul.mubr.bf16.gmra.mrb[0].mxu0 %v93
    %v179 = vpop.f32.mrb[0].mxu0
    %v180 = vadd.f32 %v60, %v179
    %v181 = vpop.f32.mrb[0].mxu0
    %v182 = vpop.f32.mrb[0].mxu0
    %v183 = vadd.f32 %v60, %v182
    %v184 = vpop.f32.mrb[0].mxu0
    %185 = vmatprep.mubr.bf16.mxu0 0
    %186 = vmatmul.mubr.bf16.gmra.mrb[0].mxu0 %v96
    %v187 = vpop.f32.mrb[0].mxu0
    %v188 = vadd.f32 %v60, %v187
    %v189 = vpop.f32.mrb[0].mxu0
    %v190 = vpop.f32.mrb[0].mxu0
    %v191 = vadd.f32 %v60, %v190
    %v192 = vpop.f32.mrb[0].mxu0
    %193 = vmatprep.mubr.bf16.mxu0 0
    %194 = vmatmul.mubr.bf16.gmra.mrb[0].mxu0 %v99
    %v195 = vpop.f32.mrb[0].mxu0
    %v196 = vadd.f32 %v60, %v195
    %v197 = vpop.f32.mrb[0].mxu0
    %v198 = vpop.f32.mrb[0].mxu0
    %v199 = vadd.f32 %v60, %v198
    %v200 = vpop.f32.mrb[0].mxu0
    %201 = vdwg.mxu0
    %v202 = vmax.f32 %v140, 0.0
    %v203 = vmax.f32 %v143, 0.0
    %v204 = vmax.f32 %v148, 0.0
    %v205 = vmax.f32 %v151, 0.0
    %v206 = vmax.f32 %v156, 0.0
    %v207 = vmax.f32 %v159, 0.0
    %v208 = vmax.f32 %v164, 0.0
    %v209 = vmax.f32 %v167, 0.0
    %v210 = vmax.f32 %v172, 0.0
    %v211 = vmax.f32 %v175, 0.0
    %v212 = vmax.f32 %v180, 0.0
    %v213 = vmax.f32 %v183, 0.0
    %v214 = vmax.f32 %v188, 0.0
    %v215 = vmax.f32 %v191, 0.0
    %v216 = vmax.f32 %v196, 0.0
    %v217 = vmax.f32 %v199, 0.0
    %v218 = vpack.c.bf16 %v203, %v202
    %v219 = vpack.c.bf16 %v205, %v204
    %v220 = vpack.c.bf16 %v207, %v206
    %v221 = vpack.c.bf16 %v209, %v208
    %v222 = vpack.c.bf16 %v211, %v210
    %v223 = vpack.c.bf16 %v213, %v212
    %v224 = vpack.c.bf16 %v215, %v214
    %v225 = vpack.c.bf16 %v217, %v216
    %v226 = vlaneseq
    %v227 = vshrl.u32 %v226, 7
    %v228 = vsub.s32 0, %v227
    %v229 = vrot.slane %v55, %v228
    %v232 = vunpack.c.l.b16 %v51
    %v233 = vunpack.c.l.b16 %v52
    %v234 = vpack.c.b16 %v233, %v232
    %vm236 = vcmask 130048
    %v238 = vsel %vm236, %v218, 0
    %v241 = vsel %vm236, %v219, 0
    %v244 = vsel %vm236, %v220, 0
    %v247 = vsel %vm236, %v221, 0
    %v250 = vsel %vm236, %v222, 0
    %v253 = vsel %vm236, %v223, 0
    %v256 = vsel %vm236, %v224, 0
    %v259 = vsel %vm236, %v225, 0
    %261 = vmatprep.subr.bf16.mxu0 0
    %262 = vmatpush1.bf16.msra.mxu0 %v234
    %263 = vmatprep.subr.bf16.mxu0 0
    %264 = vmatpush1.bf16.msra.mxu0 0
    %265 = vmatprep.subr.bf16.mxu0 0
    %266 = vmatpush1.bf16.msra.mxu0 0
    %267 = vmatprep.subr.bf16.mxu0 0
    %268 = vmatpush1.bf16.msra.mxu0 0
    %269 = vmatprep.subr.bf16.mxu0 0
    %270 = vmatpush1.bf16.msra.mxu0 0
    %271 = vmatprep.subr.bf16.mxu0 0
    %272 = vmatpush1.bf16.msra.mxu0 0
    %273 = vmatprep.subr.bf16.mxu0 0
    %274 = vmatpush1.bf16.msra.mxu0 0
    %275 = vmatprep.subr.bf16.mxu0 0
    %276 = vmatpush1.bf16.msra.mxu0 0
    %277 = vmatprep.subr.bf16.mxu0 0
    %278 = vmatpush1.bf16.msra.mxu0 0
    %279 = vmatprep.subr.bf16.mxu0 0
    %280 = vmatpush1.bf16.msra.mxu0 0
    %281 = vmatprep.subr.bf16.mxu0 0
    %282 = vmatpush1.bf16.msra.mxu0 0
    %283 = vmatprep.subr.bf16.mxu0 0
    %284 = vmatpush1.bf16.msra.mxu0 0
    %285 = vmatprep.subr.bf16.mxu0 0
    %286 = vmatpush1.bf16.msra.mxu0 0
    %287 = vmatprep.subr.bf16.mxu0 0
    %288 = vmatpush1.bf16.msra.mxu0 0
    %289 = vmatprep.subr.bf16.mxu0 0
    %290 = vmatpush1.bf16.msra.mxu0 0
    %291 = vmatprep.subr.bf16.mxu0 0
    %292 = vmatpush1.bf16.msra.mxu0 0
    %293 = vmatprep.mubr.bf16.mxu0 0
    %294 = vmatmul.mubr.bf16.gmra.mrb[0].mxu0 %v238
    %v295 = vpop.f32.mrb[0].mxu0
    %v296 = vadd.f32 %v229, %v295
    %v297 = vpop.f32.mrb[0].mxu0
    %v298 = vpop.f32.mrb[0].mxu0
    %v299 = vadd.f32 %v229, %v298
    %v300 = vpop.f32.mrb[0].mxu0
    %301 = vmatprep.mubr.bf16.mxu0 0
    %302 = vmatmul.mubr.bf16.gmra.mrb[0].mxu0 %v241
    %v303 = vpop.f32.mrb[0].mxu0
    %v304 = vadd.f32 %v229, %v303
    %v305 = vpop.f32.mrb[0].mxu0
    %v306 = vpop.f32.mrb[0].mxu0
    %v307 = vadd.f32 %v229, %v306
    %v308 = vpop.f32.mrb[0].mxu0
    %309 = vmatprep.mubr.bf16.mxu0 0
    %310 = vmatmul.mubr.bf16.gmra.mrb[0].mxu0 %v244
    %v311 = vpop.f32.mrb[0].mxu0
    %v312 = vadd.f32 %v229, %v311
    %v313 = vpop.f32.mrb[0].mxu0
    %v314 = vpop.f32.mrb[0].mxu0
    %v315 = vadd.f32 %v229, %v314
    %v316 = vpop.f32.mrb[0].mxu0
    %317 = vmatprep.mubr.bf16.mxu0 0
    %318 = vmatmul.mubr.bf16.gmra.mrb[0].mxu0 %v247
    %v319 = vpop.f32.mrb[0].mxu0
    %v320 = vadd.f32 %v229, %v319
    %v321 = vpop.f32.mrb[0].mxu0
    %v322 = vpop.f32.mrb[0].mxu0
    %v323 = vadd.f32 %v229, %v322
    %v324 = vpop.f32.mrb[0].mxu0
    %325 = vmatprep.mubr.bf16.mxu0 0
    %326 = vmatmul.mubr.bf16.gmra.mrb[0].mxu0 %v250
    %v327 = vpop.f32.mrb[0].mxu0
    %v328 = vadd.f32 %v229, %v327
    %v329 = vpop.f32.mrb[0].mxu0
    %v330 = vpop.f32.mrb[0].mxu0
    %v331 = vadd.f32 %v229, %v330
    %v332 = vpop.f32.mrb[0].mxu0
    %333 = vmatprep.mubr.bf16.mxu0 0
    %334 = vmatmul.mubr.bf16.gmra.mrb[0].mxu0 %v253
    %v335 = vpop.f32.mrb[0].mxu0
    %v336 = vadd.f32 %v229, %v335
    %v337 = vpop.f32.mrb[0].mxu0
    %v338 = vpop.f32.mrb[0].mxu0
    %v339 = vadd.f32 %v229, %v338
    %v340 = vpop.f32.mrb[0].mxu0
    %341 = vmatprep.mubr.bf16.mxu0 0
    %342 = vmatmul.mubr.bf16.gmra.mrb[0].mxu0 %v256
    %v343 = vpop.f32.mrb[0].mxu0
    %v344 = vadd.f32 %v229, %v343
    %v345 = vpop.f32.mrb[0].mxu0
    %v346 = vpop.f32.mrb[0].mxu0
    %v347 = vadd.f32 %v229, %v346
    %v348 = vpop.f32.mrb[0].mxu0
    %349 = vmatprep.mubr.bf16.mxu0 0
    %350 = vmatmul.mubr.bf16.gmra.mrb[0].mxu0 %v259
    %v351 = vpop.f32.mrb[0].mxu0
    %v352 = vadd.f32 %v229, %v351
    %v353 = vpop.f32.mrb[0].mxu0
    %v354 = vpop.f32.mrb[0].mxu0
    %v355 = vadd.f32 %v229, %v354
    %v356 = vpop.f32.mrb[0].mxu0
    %357 = vdwg.mxu0
    %v358 = vmax.f32 %v296, 0.0
    %v359 = vmax.f32 %v299, 0.0
    %v360 = vmax.f32 %v304, 0.0
    %v361 = vmax.f32 %v307, 0.0
    %v362 = vmax.f32 %v312, 0.0
    %v363 = vmax.f32 %v315, 0.0
    %v364 = vmax.f32 %v320, 0.0
    %v365 = vmax.f32 %v323, 0.0
    %v366 = vmax.f32 %v328, 0.0
    %v367 = vmax.f32 %v331, 0.0
    %v368 = vmax.f32 %v336, 0.0
    %v369 = vmax.f32 %v339, 0.0
    %v370 = vmax.f32 %v344, 0.0
    %v371 = vmax.f32 %v347, 0.0
    %v372 = vmax.f32 %v352, 0.0
    %v373 = vmax.f32 %v355, 0.0
    %v374 = vpack.c.bf16 %v359, %v358
    %v375 = vpack.c.bf16 %v361, %v360
    %v376 = vpack.c.bf16 %v363, %v362
    %v377 = vpack.c.bf16 %v365, %v364
    %v378 = vpack.c.bf16 %v367, %v366
    %v379 = vpack.c.bf16 %v369, %v368
    %v380 = vpack.c.bf16 %v371, %v370
    %v381 = vpack.c.bf16 %v373, %v372
    %v383 = vsel %vm236, %v53, 0
    %v386 = vsel %vm236, %v374, 0
    %v389 = vsel %vm236, %v375, 0
    %v392 = vsel %vm236, %v376, 0
    %v395 = vsel %vm236, %v377, 0
    %v398 = vsel %vm236, %v378, 0
    %v401 = vsel %vm236, %v379, 0
    %v404 = vsel %vm236, %v380, 0
    %v407 = vsel %vm236, %v381, 0
    %409 = vmatprep.subr.bf16.mxu0 0
    %410 = vmatpush1.bf16.xpose.msra.mxu0 %v386
    %411 = vmatprep.subr.bf16.mxu0 0
    %412 = vmatpush1.bf16.xpose.msra.mxu0 %v389
    %413 = vmatprep.subr.bf16.mxu0 0
    %414 = vmatpush1.bf16.xpose.msra.mxu0 %v392
    %415 = vmatprep.subr.bf16.mxu0 0
    %416 = vmatpush1.bf16.xpose.msra.mxu0 %v395
    %417 = vmatprep.subr.bf16.mxu0 0
    %418 = vmatpush1.bf16.xpose.msra.mxu0 %v398
    %419 = vmatprep.subr.bf16.mxu0 0
    %420 = vmatpush1.bf16.xpose.msra.mxu0 %v401
    %421 = vmatprep.subr.bf16.mxu0 0
    %422 = vmatpush1.bf16.xpose.msra.mxu0 %v404
    %423 = vmatprep.subr.bf16.mxu0 0
    %424 = vmatpush1.bf16.xpose.msra.mxu0 %v407
    %425 = vmatprep.subr.bf16.mxu0 0
    %426 = vmatpush1.bf16.xpose.msra.mxu0 0
    %427 = vmatprep.subr.bf16.mxu0 0
    %428 = vmatpush1.bf16.xpose.msra.mxu0 0
    %429 = vmatprep.subr.bf16.mxu0 0
    %430 = vmatpush1.bf16.xpose.msra.mxu0 0
    %431 = vmatprep.subr.bf16.mxu0 0
    %432 = vmatpush1.bf16.xpose.msra.mxu0 0
    %433 = vmatprep.subr.bf16.mxu0 0
    %434 = vmatpush1.bf16.xpose.msra.mxu0 0
    %435 = vmatprep.subr.bf16.mxu0 0
    %436 = vmatpush1.bf16.xpose.msra.mxu0 0
    %437 = vmatprep.subr.bf16.mxu0 0
    %438 = vmatpush1.bf16.xpose.msra.mxu0 0
    %439 = vmatprep.subr.bf16.mxu0 0
    %440 = vmatpush1.bf16.xpose.msra.mxu0 0
    %441 = vmatprep.mubr.bf16.mxu0 0
    %442 = vmatmul.mubr.bf16.gmra.mrb[0].mxu0 %v383
    %v443 = vpop.f32.mrb[0].mxu0
    %v444 = vadd.f32 0.0, %v443
    %v445 = vpop.f32.mrb[0].mxu0
    %v446 = vpop.f32.mrb[0].mxu0
    %v447 = vpop.f32.mrb[0].mxu0
    %448 = vdwg.mxu0
    %450 = vset.pattern.permute.xlu0 0
    %451 = vperm.xlu0 %450, %v56
    %v452 = vpop.permute.xlu0 %451
    %v454 = vadd.f32 %v444, %v452
    %v455 = vxor.u32 %v454, 2147483648
    %v456 = vmul.f32 %v455, 1.442695
    %v457 = vpow.pop %v456
    %v458 = vadd.f32 %v457, 1.0
    %v459 = vrcp.pop %v458
    %v460 = vmul.f32 1.0, %v459
    %461 = vst [vmem:[#allocation2] sm:$0x1] %v460
    // Predicated region
    $region22: #{tpu_custom_call.1} parent=1 // pred_check
      _
    $region23: #{tpu_custom_call.1} parent=1 // pred_check_branch
      %463 = sbr.rel (0) target = $region25
    $region24: #{tpu_custom_call.1} parent=1 // pred_region
      %s465 = ssub.s32 16, 16
      %466 = vsyncadd [#allocation3], %s465
      %s468 = sshll.u32 [#allocation2], 4
      %s469 = int_to_ptr.vmem [resolvable:$true] %s468
      %471 = dma.vmem_to_hbm [thread:$0]  %s469, 16, %s5, [#allocation3]
    $region25: #{tpu_custom_call.1} parent=1 // pred_fallthru
      _
    // Predicated region
    $region26: #{tpu_custom_call.1} parent=1 // pred_check
      _
    $region27: #{tpu_custom_call.1} parent=1 // pred_check_branch
      %473 = sbr.rel (0) target = $region29
    $region28: #{tpu_custom_call.1} parent=1 // pred_region
      %474 = dma.done [#allocation3], 16
    $region29: #{tpu_custom_call.1} parent=1 // pred_fallthru
      _
    %475 = vsyncpa [#allocation3], 1

</llo_original>
